<compile_context>
chip_gen: v7x
topology: tpu7x:2x2x1
jax: 0.10.0
libtpu: 0.0.40
codegen_flags: <defaults>
</compile_context>

<pallas_src>
import functools
import math

import jax
import jax.numpy as jnp
from jax.experimental import pallas as pl
from jax.experimental.pallas import tpu as pltpu


# -----------------------------------------------------------------------------
# Fused kernel: linear head -> reparameterize -> KL -> log q(z|x)
# -----------------------------------------------------------------------------
def _fused_encoder_kernel(
    x_ref, w_ref, b_ref, eps_ref, mulv_ref, z_ref, kl_ref, logq_ref, *, nz
):
    # One concatenated projection: [mu | logvar] = x @ [W_mu | W_lv] + [b_mu | b_lv]
    # (single MXU push, one wide lane-dense store instead of two narrow ones).
    h = (
        jnp.dot(x_ref[...], w_ref[...], preferred_element_type=jnp.float32)
        + b_ref[...]
    )
    mulv_ref[...] = h

    mu = h[:, :nz]          # (TB, nz)
    lv = h[:, nz:]          # (TB, nz)

    # reparameterize(): z = mu + eps * std, std = exp(0.5 * logvar)  (one EUP exp)
    std = jnp.exp(0.5 * lv)
    eps = eps_ref[...]                                   # (TB, ns, nz)
    z = mu[:, None, :] + eps * std[:, None, :]
    z_ref[...] = z

    # KL = 0.5 * sum(mu^2 + var - logvar - 1); reuse var = std*std (no second exp).
    var = std * std
    kl_ref[...] = 0.5 * jnp.sum(mu * mu + var - lv - 1.0, axis=1, keepdims=True)

    # log q(z|x): dev^2 * exp(-logvar) replaces dev^2 / var — one small EUP exp over
    # (TB, nz) instead of a per-element divide over (TB, ns, nz); better conditioned.
    inv_var = jnp.exp(-lv)
    dev = z - mu[:, None, :]
    logq_ref[...] = (
        -0.5 * jnp.sum(dev * dev * inv_var[:, None, :], axis=-1)
        - 0.5 * (nz * math.log(2.0 * math.pi) + jnp.sum(lv, axis=1, keepdims=True))
    )


# -----------------------------------------------------------------------------
# Wrapper
# -----------------------------------------------------------------------------
def gaussian_encode(x, w_mulv, b_mulv, eps, *, block_b=None):
    """Fused forward + reparameterize + KL + eval_inference_dist.

    Args:
      x:       (batch, d_in)        flattened input (torch x.view(batch, -1))
      w_mulv:  (d_in, 2*nz)         [W_mu | W_logvar]
      b_mulv:  (1, 2*nz)            [b_mu | b_logvar]
      eps:     (batch, ns, nz)      standard-normal noise
    Returns:
      mu (batch, nz), logvar (batch, nz), z (batch, ns, nz),
      KL (batch,), log q(z|x) (batch, ns)
    """
    batch, d_in = x.shape
    two_nz = w_mulv.shape[1]
    nz = two_nz // 2
    ns = eps.shape[1]

    if block_b is None:
        block_b = min(batch, 512)
        while batch % block_b:
            block_b //= 2
    assert batch % block_b == 0

    grid = (batch // block_b,)

    out_shape = (
        jax.ShapeDtypeStruct((batch, two_nz), jnp.float32),   # [mu | logvar]
        jax.ShapeDtypeStruct((batch, ns, nz), jnp.float32),   # z
        jax.ShapeDtypeStruct((batch, 1), jnp.float32),        # KL
        jax.ShapeDtypeStruct((batch, ns), jnp.float32),       # log q(z|x)
    )
    in_specs = [
        pl.BlockSpec((block_b, d_in), lambda i: (i, 0)),
        pl.BlockSpec((d_in, two_nz), lambda i: (0, 0)),        # weights resident
        pl.BlockSpec((1, two_nz), lambda i: (0, 0)),
        pl.BlockSpec((block_b, ns, nz), lambda i: (i, 0, 0)),
    ]
    out_specs = (
        pl.BlockSpec((block_b, two_nz), lambda i: (i, 0)),
        pl.BlockSpec((block_b, ns, nz), lambda i: (i, 0, 0)),
        pl.BlockSpec((block_b, 1), lambda i: (i, 0)),
        pl.BlockSpec((block_b, ns), lambda i: (i, 0)),
    )

    mulv, z, kl, logq = pl.pallas_call(
        functools.partial(_fused_encoder_kernel, nz=nz),
        out_shape=out_shape,
        grid=grid,
        in_specs=in_specs,
        out_specs=out_specs,
        compiler_params=pltpu.CompilerParams(
            dimension_semantics=("parallel",),      # shard batch tiles across TCs (v7x)
            vmem_limit_bytes=32 * 1024 * 1024,
        ),
    )(x, w_mulv, b_mulv, eps)

    mu = mulv[:, :nz]
    logvar = mulv[:, nz:]
    return mu, logvar, z, kl[:, 0], logq


# -----------------------------------------------------------------------------
# Main
# -----------------------------------------------------------------------------
if __name__ == "__main__":
    key = jax.random.PRNGKey(0)
    k_x, k_wmu, k_wlv, k_eps = jax.random.split(key, 4)

    batch, d_in, nz, nsamples = 16, 64, 32, 4

    x = jax.random.normal(k_x, (batch, d_in), dtype=jnp.float32)
    w_mu = jax.random.normal(k_wmu, (d_in, nz), dtype=jnp.float32) / math.sqrt(d_in)
    w_lv = jax.random.normal(k_wlv, (d_in, nz), dtype=jnp.float32) / math.sqrt(d_in)
    b_mu = jnp.zeros((1, nz), dtype=jnp.float32)
    b_lv = jnp.full((1, nz), -1.0, dtype=jnp.float32)

    # Pack the two heads into one weight/bias so the kernel does a single matmul.
    w_mulv = jnp.concatenate([w_mu, w_lv], axis=1)     # (d_in, 2*nz)
    b_mulv = jnp.concatenate([b_mu, b_lv], axis=1)     # (1, 2*nz)

    # TODO(synk): at real batch sizes, generate eps on-chip with
    # pltpu.prng_seed + pltpu.stateful_normal to halve encode-path HBM traffic;
    # kept as an explicit input here so the result is deterministic and checkable.
    eps = jax.random.normal(k_eps, (batch, nsamples, nz), dtype=jnp.float32)

    mu, logvar, z, kl, log_density = gaussian_encode(
        x, w_mulv, b_mulv, eps, block_b=8
    )
    jax.block_until_ready((mu, logvar, z, kl, log_density))

    # ---- pure-JAX reference (module semantics) --------------------------------
    mu_ref = x @ w_mu + b_mu
    lv_ref = x @ w_lv + b_lv
    std_ref = jnp.exp(0.5 * lv_ref)
    z_ref = mu_ref[:, None, :] + eps * std_ref[:, None, :]
    kl_ref = 0.5 * jnp.sum(mu_ref**2 + jnp.exp(lv_ref) - lv_ref - 1.0, axis=1)
    dev = z_ref - mu_ref[:, None, :]
    ld_ref = -0.5 * jnp.sum(
        dev**2 / jnp.exp(lv_ref)[:, None, :], axis=-1
    ) - 0.5 * (nz * math.log(2.0 * math.pi) + jnp.sum(lv_ref, axis=-1, keepdims=True))

    assert jnp.allclose(mu, mu_ref, atol=1e-4, rtol=1e-4)
    assert jnp.allclose(logvar, lv_ref, atol=1e-4, rtol=1e-4)
    assert jnp.allclose(z, z_ref, atol=1e-4, rtol=1e-4)
    assert jnp.allclose(kl, kl_ref, atol=1e-4, rtol=1e-4)
    assert jnp.allclose(log_density, ld_ref, atol=1e-3, rtol=1e-4)

    print("KERNEL_OK")
</pallas_src>

<mosaic_0001>
module attributes {stable_mosaic.version = 11 : i64} {
  func.func @_fused_encoder_kernel(%arg0: i32, %arg1: memref<8x64xf32, #tpu.memory_space<vmem>>, %arg2: memref<64x64xf32, #tpu.memory_space<vmem>>, %arg3: memref<1x64xf32, #tpu.memory_space<vmem>>, %arg4: memref<8x4x32xf32, #tpu.memory_space<vmem>>, %arg5: memref<8x64xf32, #tpu.memory_space<vmem>>, %arg6: memref<8x4x32xf32, #tpu.memory_space<vmem>>, %arg7: memref<8x1xf32, #tpu.memory_space<vmem>>, %arg8: memref<8x4xf32, #tpu.memory_space<vmem>>) attributes {dimension_semantics = [#tpu.dimension_semantics<parallel>], iteration_bounds = array<i64: 2>, scalar_prefetch = 0 : i64, scratch_operands = 0 : i64, tpu.core_type = #tpu.core_type<tc>, window_params = [{transform_indices = @transform_0, window_bounds = array<i64: 8, 64>}, {pipeline_mode = #tpu.pipeline_mode<synchronous>, transform_indices = @transform_1, window_bounds = array<i64: 64, 64>}, {pipeline_mode = #tpu.pipeline_mode<synchronous>, transform_indices = @transform_2, window_bounds = array<i64: 1, 64>}, {transform_indices = @transform_3, window_bounds = array<i64: 8, 4, 32>}, {transform_indices = @transform_4, window_bounds = array<i64: 8, 64>}, {transform_indices = @transform_5, window_bounds = array<i64: 8, 4, 32>}, {transform_indices = @transform_6, window_bounds = array<i64: 8, 1>}, {transform_indices = @transform_7, window_bounds = array<i64: 8, 4>}]} {
    %c0 = arith.constant 0 : index
    %c0_0 = arith.constant 0 : index
    %0 = vector.load %arg1[%c0, %c0_0] : memref<8x64xf32, #tpu.memory_space<vmem>>, vector<8x64xf32>
    %c0_1 = arith.constant 0 : index
    %c0_2 = arith.constant 0 : index
    %1 = vector.load %arg2[%c0_1, %c0_2] : memref<64x64xf32, #tpu.memory_space<vmem>>, vector<64x64xf32>
    %cst = arith.constant dense<0.000000e+00> : vector<8x64xf32>
    %2 = tpu.matmul %0, %1, %cst {dimension_numbers = #tpu.dot_dimension_numbers<[1], [0], [0], [1], [0, 0, 1, 1], [], []>} : vector<8x64xf32>, vector<64x64xf32>, vector<8x64xf32> -> vector<8x64xf32>
    %c0_3 = arith.constant 0 : index
    %c0_4 = arith.constant 0 : index
    %3 = vector.load %arg3[%c0_3, %c0_4] : memref<1x64xf32, #tpu.memory_space<vmem>>, vector<1x64xf32>
    %4 = vector.broadcast %3 : vector<1x64xf32> to vector<8x64xf32>
    %5 = arith.addf %2, %4 : vector<8x64xf32>
    %c0_5 = arith.constant 0 : index
    %c0_6 = arith.constant 0 : index
    %6 = vector.load %arg5[%c0_5, %c0_6] : memref<8x64xf32, #tpu.memory_space<vmem>>, vector<8x64xf32>
    tpu.vector_store %arg5[%c0_5, %c0_6], %5 {strides = array<i32>} : memref<8x64xf32, #tpu.memory_space<vmem>>, vector<8x64xf32>,
    %7 = vector.extract_strided_slice %5 {offsets = [0, 0], sizes = [8, 32], strides = [1, 1]} : vector<8x64xf32> to vector<8x32xf32>
    %8 = vector.extract_strided_slice %5 {offsets = [0, 32], sizes = [8, 32], strides = [1, 1]} : vector<8x64xf32> to vector<8x32xf32>
    %cst_7 = arith.constant 5.000000e-01 : f32
    %9 = vector.broadcast %cst_7 : f32 to vector<8x32xf32>
    %10 = arith.mulf %9, %8 : vector<8x32xf32>
    %11 = math.exp %10 : vector<8x32xf32>
    %c0_8 = arith.constant 0 : index
    %c0_9 = arith.constant 0 : index
    %c0_10 = arith.constant 0 : index
    %12 = vector.load %arg4[%c0_8, %c0_9, %c0_10] : memref<8x4x32xf32, #tpu.memory_space<vmem>>, vector<8x4x32xf32>
    %13 = vector.shape_cast %7 : vector<8x32xf32> to vector<8x1x32xf32>
    %14 = vector.shape_cast %11 : vector<8x32xf32> to vector<8x1x32xf32>
    %15 = vector.broadcast %14 : vector<8x1x32xf32> to vector<8x4x32xf32>
    %16 = arith.mulf %12, %15 : vector<8x4x32xf32>
    %17 = vector.broadcast %13 : vector<8x1x32xf32> to vector<8x4x32xf32>
    %18 = arith.addf %17, %16 : vector<8x4x32xf32>
    %c0_11 = arith.constant 0 : index
    %c0_12 = arith.constant 0 : index
    %c0_13 = arith.constant 0 : index
    %19 = vector.load %arg6[%c0_11, %c0_12, %c0_13] : memref<8x4x32xf32, #tpu.memory_space<vmem>>, vector<8x4x32xf32>
    tpu.vector_store %arg6[%c0_11, %c0_12, %c0_13], %18 {strides = array<i32>} : memref<8x4x32xf32, #tpu.memory_space<vmem>>, vector<8x4x32xf32>,
    %20 = arith.mulf %11, %11 : vector<8x32xf32>
    %21 = arith.mulf %7, %7 : vector<8x32xf32>
    %22 = arith.addf %21, %20 : vector<8x32xf32>
    %23 = arith.subf %22, %8 : vector<8x32xf32>
    %cst_14 = arith.constant 1.000000e+00 : f32
    %24 = vector.broadcast %cst_14 : f32 to vector<8x32xf32>
    %25 = arith.subf %23, %24 : vector<8x32xf32>
    %cst_15 = arith.constant dense<0.000000e+00> : vector<8xf32>
    %26 = vector.multi_reduction <add>, %25, %cst_15 [1] : vector<8x32xf32> to vector<8xf32>
    %27 = vector.shape_cast %26 : vector<8xf32> to vector<8x1xf32>
    %cst_16 = arith.constant 5.000000e-01 : f32
    %28 = vector.broadcast %cst_16 : f32 to vector<8x1xf32>
    %29 = arith.mulf %28, %27 : vector<8x1xf32>
    %c0_17 = arith.constant 0 : index
    %c0_18 = arith.constant 0 : index
    %30 = vector.load %arg7[%c0_17, %c0_18] : memref<8x1xf32, #tpu.memory_space<vmem>>, vector<8x1xf32>
    tpu.vector_store %arg7[%c0_17, %c0_18], %29 {strides = array<i32>} : memref<8x1xf32, #tpu.memory_space<vmem>>, vector<8x1xf32>,
    %cst_19 = arith.constant 0.000000e+00 : f32
    %31 = vector.broadcast %cst_19 : f32 to vector<8x32xf32>
    %32 = arith.subf %31, %8 : vector<8x32xf32>
    %33 = math.exp %32 : vector<8x32xf32>
    %34 = vector.shape_cast %7 : vector<8x32xf32> to vector<8x1x32xf32>
    %35 = vector.broadcast %34 : vector<8x1x32xf32> to vector<8x4x32xf32>
    %36 = arith.subf %18, %35 : vector<8x4x32xf32>
    %37 = arith.mulf %36, %36 : vector<8x4x32xf32>
    %38 = vector.shape_cast %33 : vector<8x32xf32> to vector<8x1x32xf32>
    %39 = vector.broadcast %38 : vector<8x1x32xf32> to vector<8x4x32xf32>
    %40 = arith.mulf %37, %39 : vector<8x4x32xf32>
    %cst_20 = arith.constant dense<0.000000e+00> : vector<8x4xf32>
    %41 = vector.multi_reduction <add>, %40, %cst_20 [2] : vector<8x4x32xf32> to vector<8x4xf32>
    %cst_21 = arith.constant -5.000000e-01 : f32
    %42 = vector.broadcast %cst_21 : f32 to vector<8x4xf32>
    %43 = arith.mulf %42, %41 : vector<8x4xf32>
    %cst_22 = arith.constant dense<0.000000e+00> : vector<8xf32>
    %44 = vector.multi_reduction <add>, %8, %cst_22 [1] : vector<8x32xf32> to vector<8xf32>
    %45 = vector.shape_cast %44 : vector<8xf32> to vector<8x1xf32>
    %cst_23 = arith.constant 58.8120651 : f32
    %46 = vector.broadcast %cst_23 : f32 to vector<8x1xf32>
    %47 = arith.addf %46, %45 : vector<8x1xf32>
    %cst_24 = arith.constant 5.000000e-01 : f32
    %48 = vector.broadcast %cst_24 : f32 to vector<8x1xf32>
    %49 = arith.mulf %48, %47 : vector<8x1xf32>
    %50 = vector.broadcast %49 : vector<8x1xf32> to vector<8x4xf32>
    %51 = arith.subf %43, %50 : vector<8x4xf32>
    %c0_25 = arith.constant 0 : index
    %c0_26 = arith.constant 0 : index
    %52 = vector.load %arg8[%c0_25, %c0_26] : memref<8x4xf32, #tpu.memory_space<vmem>>, vector<8x4xf32>
    tpu.vector_store %arg8[%c0_25, %c0_26], %51 {strides = array<i32>} : memref<8x4xf32, #tpu.memory_space<vmem>>, vector<8x4xf32>,
    return
  }
  func.func @transform_0(%arg0: i32) -> (i32, i32) {
    %c0_i32 = arith.constant 0 : i32
    %c0_i32_0 = arith.constant 0 : i32
    return %arg0, %c0_i32 : i32, i32
  }
  func.func @transform_1(%arg0: i32) -> (i32, i32) {
    %c0_i32 = arith.constant 0 : i32
    %c0_i32_0 = arith.constant 0 : i32
    %c0_i32_1 = arith.constant 0 : i32
    return %c0_i32, %c0_i32_0 : i32, i32
  }
  func.func @transform_2(%arg0: i32) -> (i32, i32) {
    %c0_i32 = arith.constant 0 : i32
    %c0_i32_0 = arith.constant 0 : i32
    %c0_i32_1 = arith.constant 0 : i32
    return %c0_i32, %c0_i32_0 : i32, i32
  }
  func.func @transform_3(%arg0: i32) -> (i32, i32, i32) {
    %c0_i32 = arith.constant 0 : i32
    %c0_i32_0 = arith.constant 0 : i32
    %c0_i32_1 = arith.constant 0 : i32
    return %arg0, %c0_i32, %c0_i32_0 : i32, i32, i32
  }
  func.func @transform_4(%arg0: i32) -> (i32, i32) {
    %c0_i32 = arith.constant 0 : i32
    %c0_i32_0 = arith.constant 0 : i32
    return %arg0, %c0_i32 : i32, i32
  }
  func.func @transform_5(%arg0: i32) -> (i32, i32, i32) {
    %c0_i32 = arith.constant 0 : i32
    %c0_i32_0 = arith.constant 0 : i32
    %c0_i32_1 = arith.constant 0 : i32
    return %arg0, %c0_i32, %c0_i32_0 : i32, i32, i32
  }
  func.func @transform_6(%arg0: i32) -> (i32, i32) {
    %c0_i32 = arith.constant 0 : i32
    %c0_i32_0 = arith.constant 0 : i32
    return %arg0, %c0_i32 : i32, i32
  }
  func.func @transform_7(%arg0: i32) -> (i32, i32) {
    %c0_i32 = arith.constant 0 : i32
    %c0_i32_0 = arith.constant 0 : i32
    return %arg0, %c0_i32 : i32, i32
  }
}

</mosaic_0001>

<llo_original>
// kernel: tpu_custom_call.1
$region0: #{tpu_custom_call.1}
  #allocation0 [shape = 'u32[]', space=smem, size = 0x4, offset = 0x4, fixed_abs, tag = 'smem constant byte address 0x4 - core index']
  #allocation1 [shape = 'u32[144,128]{1,0:T(1,128)}', space=vmem, size = 0x12000, scoped, tag = 'internal scratch']
  %s0 = inlined_call_operand.hbm [shape: f32[16,64], index: 0, kind: input, shape index: {}]
  %s1 = inlined_call_operand.hbm [shape: f32[64,64], index: 1, kind: input, shape index: {}]
  %s2 = inlined_call_operand.vmem [shape: f32[1,64], index: 2, kind: input, shape index: {}]
  %s3 = inlined_call_operand.hbm [shape: f32[16,4,32], index: 3, kind: input, shape index: {}]
  %s4 = inlined_call_operand.hbm [shape: f32[16,64], index: 4, kind: output, shape index: {0}]
  %s5 = inlined_call_operand.hbm [shape: f32[16,4,32], index: 5, kind: output, shape index: {1}]
  %s6 = inlined_call_operand.vmem [shape: f32[16,1], index: 6, kind: output, shape index: {2}]
  %s7 = inlined_call_operand.vmem [shape: f32[16,4], index: 7, kind: output, shape index: {3}]
  %8 = xla_tuple %s4, %s5, %s6, %s7
  %s9 = sld [smem:[#allocation0]]
  $region85: #{tpu_custom_call.1} parent=0
    _
  %s11 = ssub.s32 1, %s9
  %s12 = scalar_select 0, %s11, %s9
  $region1: #{tpu_custom_call.1} parent=0
    #allocation2 [shape = 'u8[8192]{0}', space=vmem, size = 0x2000, scoped, tag = 'input window, operand 0']
    #allocation3 [shape = 's32[2]{0}', space=sflag, size = 0x8, scoped, tag = 'scoped memory for tpu_custom_call.1']
    #allocation4 [shape = 's32[2]{0}', space=sflag, size = 0x8, scoped, tag = 'scoped memory for tpu_custom_call.1']
    #allocation5 [shape = 'u8[32768]{0}', space=vmem, size = 0x8000, scoped, tag = 'input window, operand 1, single buffered']
    #allocation6 [shape = 's32[1]{0}', space=sflag, size = 0x4, scoped, tag = 'scoped memory for tpu_custom_call.1']
    #allocation7 [shape = 'u8[32768]{0}', space=vmem, size = 0x8000, scoped, tag = 'input window, operand 3']
    #allocation8 [shape = 'u8[8192]{0}', space=vmem, size = 0x2000, scoped, tag = 'output window, operand 0']
    #allocation9 [shape = 'u8[32768]{0}', space=vmem, size = 0x8000, scoped, tag = 'output window, operand 1']
    #allocation10 [shape = 's32[2]{0}', space=sflag, size = 0x8, scoped, tag = 'scoped memory for tpu_custom_call.1']
    %13 = vsyncpa [#allocation3], 0
    %s14 = scalar_lea.sflag [#allocation3], 1
    %15 = vsyncpa %s14, 0
    %16 = vsyncpa [#allocation6], 0
    %17 = vsyncpa [#allocation4], 0
    %s18 = scalar_lea.sflag [#allocation4], 1
    %19 = vsyncpa %s18, 0
    %20 = vsyncpa [#allocation10], 0
    %s21 = scalar_lea.sflag [#allocation10], 1
    %22 = vsyncpa %s21, 0
    loop: start=0, step=1, limit=4
    $region2: #{tpu_custom_call.1} parent=1 // loop_pre_header
      _
    $region3: #{tpu_custom_call.1} parent=1 // loop_header
      %s24 = sphi 0, %s28
      %p25 = scmp.ge.s32.totalorder %s24, 4
      %s34 = sphi 0, %s36
      %s37 = sphi 0, %s34
      %s38 = sphi 0, %s37
      %s54 = sphi 0, %s38
      %s58 = sphi 0, %s58
      %s60 = sphi 0, %s58
      %s61 = sphi 0, %s60
      %s75 = sphi 0, %s61
      %s79 = sphi 0, %s79
      %s81 = sphi 0, %s79
      %s82 = sphi 0, %s81
      %s96 = sphi 0, %s82
      %s102 = sphi 0, %s104
      %s105 = sphi 0, %s102
      %s106 = sphi 0, %s105
      %s122 = sphi 0, %s106
      %s128 = sphi 0, %s130
      %s131 = sphi 0, %s128
      %s132 = sphi 0, %s131
      %s148 = sphi 0, %s132
      %s154 = sphi 0, %s156
      %s157 = sphi 0, %s154
      %s158 = sphi 0, %s157
      %s174 = sphi 0, %s158
      %s180 = sphi 0, %s182
      %s183 = sphi 0, %s180
      %s184 = sphi 0, %s183
      %s200 = sphi 0, %s184
      %s206 = sphi 0, %s208
      %s209 = sphi 0, %s206
      %s210 = sphi 0, %s209
      %s226 = sphi 0, %s210
    $region4: #{tpu_custom_call.1} parent=1 // loop_header_branch
      %27 = sbr.rel (%p25) target = $region8
    $region5: #{tpu_custom_call.1} parent=1 // loop_body
      %s29 = ssub.s32 %s24, 1
      %s30 = ssub.s32 %s24, 2
      %s31 = sadd.s32 %s24, 1
      %s32 = ssub.s32 %s24, %s31
      %p33 = scmp.eq.s32.totalorder %s32, 0
      %s35 = sadd.s32 %s34, 1
      %s36 = scalar_select %p33, %s34, %s35
      %p39 = pneg %p33
      %p40 = scmp.eq.s32.totalorder %s24, 1
      %p41 = por %p39, %p40
      %p42 = scmp.ne.s32.totalorder %s34, %s37
      %p43 = scmp.eq.s32.totalorder %s24, 0
      %p44 = por %p42, %p43
      %p45 = scmp.ne.s32.totalorder %s34, %s37
      %p46 = scmp.eq.s32.totalorder %s29, 1
      %p47 = por %p45, %p46
      %p48 = scmp.ne.s32.totalorder %s37, %s38
      %p49 = scmp.eq.s32.totalorder %s29, 0
      %p50 = por %p48, %p49
      %p51 = scmp.ne.s32.totalorder %s37, %s38
      %p52 = scmp.eq.s32.totalorder %s30, 1
      %p53 = por %p51, %p52
      %p55 = scmp.ne.s32.totalorder %s38, %s54
      %p56 = scmp.eq.s32.totalorder %s30, 0
      %p57 = por %p55, %p56
      %s59 = sadd.s32 %s58, 1
      %p62 = scmp.eq.s32.totalorder %s24, 1
      %p63 = scmp.ne.s32.totalorder %s58, %s60
      %p64 = scmp.eq.s32.totalorder %s24, 0
      %p65 = por %p63, %p64
      %p66 = scmp.ne.s32.totalorder %s58, %s60
      %p67 = scmp.eq.s32.totalorder %s29, 1
      %p68 = por %p66, %p67
      %p69 = scmp.ne.s32.totalorder %s60, %s61
      %p70 = scmp.eq.s32.totalorder %s29, 0
      %p71 = por %p69, %p70
      %p72 = scmp.ne.s32.totalorder %s60, %s61
      %p73 = scmp.eq.s32.totalorder %s30, 1
      %p74 = por %p72, %p73
      %p76 = scmp.ne.s32.totalorder %s61, %s75
      %p77 = scmp.eq.s32.totalorder %s30, 0
      %p78 = por %p76, %p77
      %s80 = sadd.s32 %s79, 1
      %p83 = scmp.eq.s32.totalorder %s24, 1
      %p84 = scmp.ne.s32.totalorder %s79, %s81
      %p85 = scmp.eq.s32.totalorder %s24, 0
      %p86 = por %p84, %p85
      %p87 = scmp.ne.s32.totalorder %s79, %s81
      %p88 = scmp.eq.s32.totalorder %s29, 1
      %p89 = por %p87, %p88
      %p90 = scmp.ne.s32.totalorder %s81, %s82
      %p91 = scmp.eq.s32.totalorder %s29, 0
      %p92 = por %p90, %p91
      %p93 = scmp.ne.s32.totalorder %s81, %s82
      %p94 = scmp.eq.s32.totalorder %s30, 1
      %p95 = por %p93, %p94
      %p97 = scmp.ne.s32.totalorder %s82, %s96
      %p98 = scmp.eq.s32.totalorder %s30, 0
      %p99 = por %p97, %p98
      %s100 = ssub.s32 %s24, %s31
      %p101 = scmp.eq.s32.totalorder %s100, 0
      %s103 = sadd.s32 %s102, 1
      %s104 = scalar_select %p101, %s102, %s103
      %p107 = pneg %p101
      %p108 = scmp.eq.s32.totalorder %s24, 1
      %p109 = por %p107, %p108
      %p110 = scmp.ne.s32.totalorder %s102, %s105
      %p111 = scmp.eq.s32.totalorder %s24, 0
      %p112 = por %p110, %p111
      %p113 = scmp.ne.s32.totalorder %s102, %s105
      %p114 = scmp.eq.s32.totalorder %s29, 1
      %p115 = por %p113, %p114
      %p116 = scmp.ne.s32.totalorder %s105, %s106
      %p117 = scmp.eq.s32.totalorder %s29, 0
      %p118 = por %p116, %p117
      %p119 = scmp.ne.s32.totalorder %s105, %s106
      %p120 = scmp.eq.s32.totalorder %s30, 1
      %p121 = por %p119, %p120
      %p123 = scmp.ne.s32.totalorder %s106, %s122
      %p124 = scmp.eq.s32.totalorder %s30, 0
      %p125 = por %p123, %p124
      %s126 = ssub.s32 %s24, %s31
      %p127 = scmp.eq.s32.totalorder %s126, 0
      %s129 = sadd.s32 %s128, 1
      %s130 = scalar_select %p127, %s128, %s129
      %p133 = pneg %p127
      %p134 = scmp.eq.s32.totalorder %s24, 1
      %p135 = por %p133, %p134
      %p136 = scmp.ne.s32.totalorder %s128, %s131
      %p137 = scmp.eq.s32.totalorder %s24, 0
      %p138 = por %p136, %p137
      %p139 = scmp.ne.s32.totalorder %s128, %s131
      %p140 = scmp.eq.s32.totalorder %s29, 1
      %p141 = por %p139, %p140
      %p142 = scmp.ne.s32.totalorder %s131, %s132
      %p143 = scmp.eq.s32.totalorder %s29, 0
      %p144 = por %p142, %p143
      %p145 = scmp.ne.s32.totalorder %s131, %s132
      %p146 = scmp.eq.s32.totalorder %s30, 1
      %p147 = por %p145, %p146
      %p149 = scmp.ne.s32.totalorder %s132, %s148
      %p150 = scmp.eq.s32.totalorder %s30, 0
      %p151 = por %p149, %p150
      %s152 = ssub.s32 %s24, %s31
      %p153 = scmp.eq.s32.totalorder %s152, 0
      %s155 = sadd.s32 %s154, 1
      %s156 = scalar_select %p153, %s154, %s155
      %p159 = pneg %p153
      %p160 = scmp.eq.s32.totalorder %s24, 1
      %p161 = por %p159, %p160
      %p162 = scmp.ne.s32.totalorder %s154, %s157
      %p163 = scmp.eq.s32.totalorder %s24, 0
      %p164 = por %p162, %p163
      %p165 = scmp.ne.s32.totalorder %s154, %s157
      %p166 = scmp.eq.s32.totalorder %s29, 1
      %p167 = por %p165, %p166
      %p168 = scmp.ne.s32.totalorder %s157, %s158
      %p169 = scmp.eq.s32.totalorder %s29, 0
      %p170 = por %p168, %p169
      %p171 = scmp.ne.s32.totalorder %s157, %s158
      %p172 = scmp.eq.s32.totalorder %s30, 1
      %p173 = por %p171, %p172
      %p175 = scmp.ne.s32.totalorder %s158, %s174
      %p176 = scmp.eq.s32.totalorder %s30, 0
      %p177 = por %p175, %p176
      %s178 = ssub.s32 %s24, %s31
      %p179 = scmp.eq.s32.totalorder %s178, 0
      %s181 = sadd.s32 %s180, 1
      %s182 = scalar_select %p179, %s180, %s181
      %p185 = pneg %p179
      %p186 = scmp.eq.s32.totalorder %s24, 1
      %p187 = por %p185, %p186
      %p188 = scmp.ne.s32.totalorder %s180, %s183
      %p189 = scmp.eq.s32.totalorder %s24, 0
      %p190 = por %p188, %p189
      %p191 = scmp.ne.s32.totalorder %s180, %s183
      %p192 = scmp.eq.s32.totalorder %s29, 1
      %p193 = por %p191, %p192
      %p194 = scmp.ne.s32.totalorder %s183, %s184
      %p195 = scmp.eq.s32.totalorder %s29, 0
      %p196 = por %p194, %p195
      %p197 = scmp.ne.s32.totalorder %s183, %s184
      %p198 = scmp.eq.s32.totalorder %s30, 1
      %p199 = por %p197, %p198
      %p201 = scmp.ne.s32.totalorder %s184, %s200
      %p202 = scmp.eq.s32.totalorder %s30, 0
      %p203 = por %p201, %p202
      %s204 = ssub.s32 %s24, %s31
      %p205 = scmp.eq.s32.totalorder %s204, 0
      %s207 = sadd.s32 %s206, 1
      %s208 = scalar_select %p205, %s206, %s207
      %p211 = pneg %p205
      %p212 = scmp.eq.s32.totalorder %s24, 1
      %p213 = por %p211, %p212
      %p214 = scmp.ne.s32.totalorder %s206, %s209
      %p215 = scmp.eq.s32.totalorder %s24, 0
      %p216 = por %p214, %p215
      %p217 = scmp.ne.s32.totalorder %s206, %s209
      %p218 = scmp.eq.s32.totalorder %s29, 1
      %p219 = por %p217, %p218
      %p220 = scmp.ne.s32.totalorder %s209, %s210
      %p221 = scmp.eq.s32.totalorder %s29, 0
      %p222 = por %p220, %p221
      %p223 = scmp.ne.s32.totalorder %s209, %s210
      %p224 = scmp.eq.s32.totalorder %s30, 1
      %p225 = por %p223, %p224
      %p227 = scmp.ne.s32.totalorder %s210, %s226
      %p228 = scmp.eq.s32.totalorder %s30, 0
      %p229 = por %p227, %p228
      %p230 = scmp.le.s32.totalorder 1, %s24
      %p231 = scmp.lt.s32.totalorder %s24, 3
      %p232 = pnand %p230, %p231
      %p233 = pneg %p232
      // Predicated region
      $region9: #{tpu_custom_call.1} parent=5 // pred_check
        _
      $region10: #{tpu_custom_call.1} parent=5 // pred_check_branch
        %235 = sbr.rel (%p232) target = $region12
      $region11: #{tpu_custom_call.1} parent=5 // pred_region
        %s236 = ssub.s32 %s24, 1
        // Predicated region
        $region13: #{tpu_custom_call.1} parent=11 // pred_check
          %p237 = pneg %p71
        $region14: #{tpu_custom_call.1} parent=11 // pred_check_branch
          %239 = sbr.rel (%p237) target = $region16
        $region15: #{tpu_custom_call.1} parent=11 // pred_region
          %s241 = ssub.s32 1024, 1024
          %242 = vsyncadd [#allocation6], %s241
          %s243 = sshll.u32 [#allocation5], 4
          %s244 = int_to_ptr.vmem [resolvable:$true] %s243
          %249 = dma.hbm_to_vmem [thread:$0]  %s1, 1024, %s244, [#allocation6], 128, 128, 8
        $region16: #{tpu_custom_call.1} parent=11 // pred_fallthru
          _
        // Predicated region
        $region17: #{tpu_custom_call.1} parent=11 // pred_check
          %p250 = pneg %p92
        $region18: #{tpu_custom_call.1} parent=11 // pred_check_branch
          %252 = sbr.rel (%p250) target = $region20
        $region19: #{tpu_custom_call.1} parent=11 // pred_region
          _
        $region20: #{tpu_custom_call.1} parent=11 // pred_fallthru
          _
      $region12: #{tpu_custom_call.1} parent=5 // pred_fallthru
        _
      %p253 = scmp.lt.s32.totalorder %s24, 2
      // Predicated region
      $region21: #{tpu_custom_call.1} parent=5 // pred_check
        %p254 = pneg %p253
      $region22: #{tpu_custom_call.1} parent=5 // pred_check_branch
        %256 = sbr.rel (%p254) target = $region24
      $region23: #{tpu_custom_call.1} parent=5 // pred_region
        // Predicated region
        $region25: #{tpu_custom_call.1} parent=23 // pred_check
          %p257 = pneg %p44
        $region26: #{tpu_custom_call.1} parent=23 // pred_check_branch
          %259 = sbr.rel (%p257) target = $region28
        $region27: #{tpu_custom_call.1} parent=23 // pred_region
          %s260 = sand.u32 %s24, 1
          %s261 = scalar_lea.sflag [#allocation3], %s260
          %s262 = sand.u32 %s34, 1
          %s263 = smul.addr %s262, 8
          %s264 = scalar_lea.vmem [#allocation2], %s263
          %s266 = ssub.s32 128, 128
          %267 = vsyncadd %s261, %s266
          %s268 = smul.addr %s24, 128
          %s269 = scalar_lea.hbm %s0, %s268
          %s271 = sshll.u32 %s264, 4
          %s272 = int_to_ptr.vmem [resolvable:$true] %s271
          %274 = dma.hbm_to_vmem [thread:$0]  %s269, 128, %s272, %s261
        $region28: #{tpu_custom_call.1} parent=23 // pred_fallthru
          _
        // Predicated region
        $region29: #{tpu_custom_call.1} parent=23 // pred_check
          %p275 = pneg %p112
        $region30: #{tpu_custom_call.1} parent=23 // pred_check_branch
          %277 = sbr.rel (%p275) target = $region32
        $region31: #{tpu_custom_call.1} parent=23 // pred_region
          %s278 = sand.u32 %s24, 1
          %s279 = scalar_lea.sflag [#allocation3], %s278
          %s280 = sand.u32 %s102, 1
          %s281 = smul.addr %s280, 32
          %s282 = scalar_lea.vmem [#allocation7], %s281
          %s283 = smul.u32 8, %s24
          %s285 = ssub.s32 512, 512
          %286 = vsyncadd %s279, %s285
          %s287 = smul.addr %s283, 64
          %s288 = scalar_lea.hbm %s3, %s287
          %s289 = sshll.u32 %s282, 4
          %s290 = int_to_ptr.vmem [resolvable:$true] %s289
          %295 = dma.hbm_to_vmem [thread:$0]  %s288, 512, %s290, %s279, 64, 64, 4
        $region32: #{tpu_custom_call.1} parent=23 // pred_fallthru
          _
      $region24: #{tpu_custom_call.1} parent=5 // pred_fallthru
        _
      %p296 = scmp.le.s32.totalorder 1, %s24
      %p297 = scmp.lt.s32.totalorder %s24, 3
      %p298 = pnand %p296, %p297
      %p299 = pneg %p298
      // Predicated region
      $region33: #{tpu_custom_call.1} parent=5 // pred_check
        _
      $region34: #{tpu_custom_call.1} parent=5 // pred_check_branch
        %301 = sbr.rel (%p298) target = $region36
      $region35: #{tpu_custom_call.1} parent=5 // pred_region
        %s302 = ssub.s32 %s24, 1
        %s303 = sand.u32 %s29, 1
        %s304 = scalar_lea.sflag [#allocation3], %s303
        %s305 = sand.u32 %s37, 1
        %s306 = smul.addr %s305, 8
        %s307 = scalar_lea.vmem [#allocation2], %s306
        // Predicated region
        $region37: #{tpu_custom_call.1} parent=35 // pred_check
          %p308 = pneg %p50
        $region38: #{tpu_custom_call.1} parent=35 // pred_check_branch
          %310 = sbr.rel (%p308) target = $region40
        $region39: #{tpu_custom_call.1} parent=35 // pred_region
          %311 = dma.done %s304, 128
        $region40: #{tpu_custom_call.1} parent=35 // pred_fallthru
          _
        // Predicated region
        $region41: #{tpu_custom_call.1} parent=35 // pred_check
          %p312 = pneg %p71
        $region42: #{tpu_custom_call.1} parent=35 // pred_check_branch
          %314 = sbr.rel (%p312) target = $region44
        $region43: #{tpu_custom_call.1} parent=35 // pred_region
          %315 = dma.done [#allocation6], 1024
        $region44: #{tpu_custom_call.1} parent=35 // pred_fallthru
          _
        %s316 = sand.u32 %s29, 1
        %s317 = scalar_lea.sflag [#allocation3], %s316
        %s318 = sand.u32 %s105, 1
        %s319 = smul.addr %s318, 32
        %s320 = scalar_lea.vmem [#allocation7], %s319
        // Predicated region
        $region45: #{tpu_custom_call.1} parent=35 // pred_check
          %p321 = pneg %p118
        $region46: #{tpu_custom_call.1} parent=35 // pred_check_branch
          %323 = sbr.rel (%p321) target = $region48
        $region47: #{tpu_custom_call.1} parent=35 // pred_region
          %324 = dma.done %s317, 512
        $region48: #{tpu_custom_call.1} parent=35 // pred_fallthru
          _
        %s325 = sand.u32 %s29, 1
        %s326 = scalar_lea.sflag [#allocation3], %s325
        %s327 = sand.u32 %s37, 1
        %s328 = smul.addr %s327, 8
        %s329 = scalar_lea.vmem [#allocation2], %s328
        %p330 = pneg %p50
        %p331 = pneg %p47
        %p332 = pneg %p71
        %p333 = pneg %p68
        %p334 = pneg %p92
        %p335 = pneg %p89
        %s336 = sand.u32 %s29, 1
        %s337 = scalar_lea.sflag [#allocation3], %s336
        %s338 = sand.u32 %s105, 1
        %s339 = smul.addr %s338, 32
        %s340 = scalar_lea.vmem [#allocation7], %s339
        %p341 = pneg %p118
        %p342 = pneg %p115
        %p343 = pneg %p144
        %p344 = pneg %p141
        %s345 = sand.u32 %s131, 1
        %s346 = scalar_lea.sflag [#allocation4], %s345
        %s347 = sand.u32 %s131, 1
        %s348 = smul.addr %s347, 8
        %s349 = scalar_lea.vmem [#allocation8], %s348
        %p350 = pneg %p170
        %p351 = pneg %p167
        %s352 = sand.u32 %s157, 1
        %s353 = scalar_lea.sflag [#allocation10], %s352
        %s354 = sand.u32 %s157, 1
        %s355 = smul.addr %s354, 32
        %s356 = scalar_lea.vmem [#allocation9], %s355
        %p357 = pneg %p196
        %p358 = pneg %p193
        %p359 = scmp.lt.s32.totalorder %s29, 1
        %s360 = scalar_select %p359, %s29, 1
        %s361 = smul.addr %s360, 8
        %s362 = scalar_lea.vmem %s6, %s361
        %p363 = pneg %p222
        %p364 = pneg %p219
        %p365 = scmp.lt.s32.totalorder %s29, 1
        %s366 = scalar_select %p365, %s29, 1
        %s367 = smul.addr %s366, 8
        %s368 = scalar_lea.vmem %s7, %s367
        %s369 = smul.u32 8, %s29
        %s370 = smul.u32 8, %s29
        %p371 = scmp.lt.s32.totalorder %s29, 1
        %s372 = scalar_select %p371, %s29, 1
        %s373 = smul.addr %s372, 8
        %s374 = scalar_lea.vmem %s6, %s373
        %p375 = scmp.lt.s32.totalorder %s29, 1
        %s376 = scalar_select %p375, %s29, 1
        %s377 = smul.addr %s376, 8
        %s378 = scalar_lea.vmem %s7, %s377
        %v379 = vld [vmem:[%s307] sm:$0xff]
        %v380 = vld [vmem:[#allocation5] sm:$0xff]
        %v381 = vld [vmem:[#allocation5 + $0x8] sm:$0xff]
        %v382 = vld [vmem:[#allocation5 + $0x10] sm:$0xff]
        %v383 = vld [vmem:[#allocation5 + $0x18] sm:$0xff]
        %v384 = vld [vmem:[#allocation5 + $0x20] sm:$0xff]
        %v385 = vld [vmem:[#allocation5 + $0x28] sm:$0xff]
        %v386 = vld [vmem:[#allocation5 + $0x30] sm:$0xff]
        %v387 = vld [vmem:[#allocation5 + $0x38] sm:$0xff]
        %v388 = vld [vmem:[%s2] sm:$0x1]
        %v390 = vlaneseq
        %v391 = vshrl.u32 %v390, 7
        %v392 = vsub.s32 0, %v391
        %v393 = vrot.slane %v388, %v392
        %vm395 = vcmask 523264
        %v397 = vsel %vm395, %v379, 0
        %399 = vmatprep.subr.mxu0 0.0
        %400 = vmatpush1.msra.mxu0 %v380
        %401 = vmatprep.subr.mxu0 0.0
        %402 = vmatpush1.msra.mxu0 %v381
        %403 = vmatprep.subr.mxu0 0.0
        %404 = vmatpush1.msra.mxu0 %v382
        %405 = vmatprep.subr.mxu0 0.0
        %406 = vmatpush1.msra.mxu0 %v383
        %407 = vmatprep.subr.mxu0 0.0
        %408 = vmatpush1.msra.mxu0 %v384
        %409 = vmatprep.subr.mxu0 0.0
        %410 = vmatpush1.msra.mxu0 %v385
        %411 = vmatprep.subr.mxu0 0.0
        %412 = vmatpush1.msra.mxu0 %v386
        %413 = vmatprep.subr.mxu0 0.0
        %414 = vmatpush1.msra.mxu0 %v387
        %415 = vmatprep.subr.mxu0 0.0
        %416 = vmatpush1.msra.mxu0 0.0
        %417 = vmatprep.subr.mxu0 0.0
        %418 = vmatpush1.msra.mxu0 0.0
        %419 = vmatprep.subr.mxu0 0.0
        %420 = vmatpush1.msra.mxu0 0.0
        %421 = vmatprep.subr.mxu0 0.0
        %422 = vmatpush1.msra.mxu0 0.0
        %423 = vmatprep.subr.mxu0 0.0
        %424 = vmatpush1.msra.mxu0 0.0
        %425 = vmatprep.subr.mxu0 0.0
        %426 = vmatpush1.msra.mxu0 0.0
        %427 = vmatprep.subr.mxu0 0.0
        %428 = vmatpush1.msra.mxu0 0.0
        %429 = vmatprep.subr.mxu0 0.0
        %430 = vmatpush1.msra.mxu0 0.0
        %431 = vmatprep.subr.mxu0 0.0
        %432 = vmatpush1.msra.mxu0 0.0
        %433 = vmatprep.subr.mxu0 0.0
        %434 = vmatpush1.msra.mxu0 0.0
        %435 = vmatprep.subr.mxu0 0.0
        %436 = vmatpush1.msra.mxu0 0.0
        %437 = vmatprep.subr.mxu0 0.0
        %438 = vmatpush1.msra.mxu0 0.0
        %439 = vmatprep.subr.mxu0 0.0
        %440 = vmatpush1.msra.mxu0 0.0
        %441 = vmatprep.subr.mxu0 0.0
        %442 = vmatpush1.msra.mxu0 0.0
        %443 = vmatprep.subr.mxu0 0.0
        %444 = vmatpush1.msra.mxu0 0.0
        %445 = vmatprep.subr.mxu0 0.0
        %446 = vmatpush1.msra.mxu0 0.0
        %447 = vmatprep.subr.mxu0 0.0
        %448 = vmatpush1.msra.mxu0 0.0
        %449 = vmatprep.subr.mxu0 0.0
        %450 = vmatpush1.msra.mxu0 0.0
        %451 = vmatprep.subr.mxu0 0.0
        %452 = vmatpush1.msra.mxu0 0.0
        %453 = vmatprep.subr.mxu0 0.0
        %454 = vmatpush1.msra.mxu0 0.0
        %455 = vmatprep.subr.mxu0 0.0
        %456 = vmatpush1.msra.mxu0 0.0
        %457 = vmatprep.subr.mxu0 0.0
        %458 = vmatpush1.msra.mxu0 0.0
        %459 = vmatprep.subr.mxu0 0.0
        %460 = vmatpush1.msra.mxu0 0.0
        %461 = vmatprep.subr.mxu0 0.0
        %462 = vmatpush1.msra.mxu0 0.0
        %463 = vmatprep.mubr.f32.mxu0 0.0
        %464 = vmatmul.mubr.f32.gmra.mrb[0].mxu0 %v397
        %v465 = vpop.f32.mrb[0].mxu0
        %v466 = vadd.f32 %v393, %v465
        %v467 = vpop.f32.mrb[0].mxu0
        %468 = vdwg.mxu0
        %469 = vst.msk [vmem:[%s349] sm:$0xff] %vm395, %v466
        %v470 = vmul.f32 %v466, 0.5
        %v471 = vmul.f32 %v470, 1.442695
        %v472 = vpow.pop %v471
        %v473 = vld [vmem:[%s320] sm:$0xf]
        %v474 = vld [vmem:[%s320 + $0x4] sm:$0xf]
        %v475 = vld [vmem:[%s320 + $0x8] sm:$0xf]
        %v476 = vld [vmem:[%s320 + $0xc] sm:$0xf]
        %v477 = vld [vmem:[%s320 + $0x10] sm:$0xf]
        %v478 = vld [vmem:[%s320 + $0x14] sm:$0xf]
        %v479 = vld [vmem:[%s320 + $0x18] sm:$0xf]
        %v480 = vld [vmem:[%s320 + $0x1c] sm:$0xf]
        %v482 = vcombine.high %v466, %v466
        %v484 = vunpack.c.l.s4 1966171168
        %v485 = vunpack.c.0.s8 %v484
        %v486 = vlaneseq
        %v487 = vshrl.u32 %v486, 7
        %v488 = vsub.s32 %v485, %v487
        %v489 = vrot.slane %v466, %v488
        %v491 = vunpack.c.l.s4 1966171168
        %v492 = vunpack.c.0.s8 %v491
        %v493 = vlaneseq
        %v494 = vshrl.u32 %v493, 7
        %v495 = vsub.s32 %v492, %v494
        %v496 = vrot.slane %v482, %v495
        %v497 = vcombine.high %v489, %v489
        %v498 = vcombine.high %v496, %v496
        %v500 = vunpack.c.l.s4 1966171168
        %v501 = vunpack.c.0.s8 %v500
        %v502 = vlaneseq
        %v503 = vshrl.u32 %v502, 7
        %v504 = vsub.s32 %v501, %v503
        %v505 = vrot.slane %v489, %v504
        %v507 = vunpack.c.l.s4 1966171168
        %v508 = vunpack.c.0.s8 %v507
        %v509 = vlaneseq
        %v510 = vshrl.u32 %v509, 7
        %v511 = vsub.s32 %v508, %v510
        %v512 = vrot.slane %v496, %v511
        %v514 = vunpack.c.l.s4 1966171168
        %v515 = vunpack.c.0.s8 %v514
        %v516 = vlaneseq
        %v517 = vshrl.u32 %v516, 7
        %v518 = vsub.s32 %v515, %v517
        %v519 = vrot.slane %v497, %v518
        %v521 = vunpack.c.l.s4 1966171168
        %v522 = vunpack.c.0.s8 %v521
        %v523 = vlaneseq
        %v524 = vshrl.u32 %v523, 7
        %v525 = vsub.s32 %v522, %v524
        %v526 = vrot.slane %v498, %v525
        %v527 = vcombine.high %v505, %v505
        %v528 = vcombine.high %v512, %v512
        %v529 = vcombine.high %v519, %v519
        %v530 = vcombine.high %v526, %v526
        %v532 = vcombine.high %v472, %v472
        %v534 = vunpack.c.l.s4 1966171168
        %v535 = vunpack.c.0.s8 %v534
        %v536 = vlaneseq
        %v537 = vshrl.u32 %v536, 7
        %v538 = vsub.s32 %v535, %v537
        %v539 = vrot.slane %v472, %v538
        %v541 = vunpack.c.l.s4 1966171168
        %v542 = vunpack.c.0.s8 %v541
        %v543 = vlaneseq
        %v544 = vshrl.u32 %v543, 7
        %v545 = vsub.s32 %v542, %v544
        %v546 = vrot.slane %v532, %v545
        %v547 = vcombine.high %v539, %v539
        %v548 = vcombine.high %v546, %v546
        %v550 = vunpack.c.l.s4 1966171168
        %v551 = vunpack.c.0.s8 %v550
        %v552 = vlaneseq
        %v553 = vshrl.u32 %v552, 7
        %v554 = vsub.s32 %v551, %v553
        %v555 = vrot.slane %v539, %v554
        %v557 = vunpack.c.l.s4 1966171168
        %v558 = vunpack.c.0.s8 %v557
        %v559 = vlaneseq
        %v560 = vshrl.u32 %v559, 7
        %v561 = vsub.s32 %v558, %v560
        %v562 = vrot.slane %v546, %v561
        %v564 = vunpack.c.l.s4 1966171168
        %v565 = vunpack.c.0.s8 %v564
        %v566 = vlaneseq
        %v567 = vshrl.u32 %v566, 7
        %v568 = vsub.s32 %v565, %v567
        %v569 = vrot.slane %v547, %v568
        %v571 = vunpack.c.l.s4 1966171168
        %v572 = vunpack.c.0.s8 %v571
        %v573 = vlaneseq
        %v574 = vshrl.u32 %v573, 7
        %v575 = vsub.s32 %v572, %v574
        %v576 = vrot.slane %v548, %v575
        %v577 = vcombine.high %v555, %v555
        %v578 = vcombine.high %v562, %v562
        %v579 = vcombine.high %v569, %v569
        %v580 = vcombine.high %v576, %v576
        %v581 = vlaneseq
        %v582 = vshrl.u32 %v581, 7
        %v583 = vsub.s32 0, %v582
        %v584 = vrot.slane %v555, %v583
        %v585 = vlaneseq
        %v586 = vshrl.u32 %v585, 7
        %v587 = vsub.s32 0, %v586
        %v588 = vrot.slane %v569, %v587
        %v589 = vlaneseq
        %v590 = vshrl.u32 %v589, 7
        %v591 = vsub.s32 0, %v590
        %v592 = vrot.slane %v577, %v591
        %v593 = vlaneseq
        %v594 = vshrl.u32 %v593, 7
        %v595 = vsub.s32 0, %v594
        %v596 = vrot.slane %v579, %v595
        %v597 = vlaneseq
        %v598 = vshrl.u32 %v597, 7
        %v599 = vsub.s32 0, %v598
        %v600 = vrot.slane %v562, %v599
        %v601 = vlaneseq
        %v602 = vshrl.u32 %v601, 7
        %v603 = vsub.s32 0, %v602
        %v604 = vrot.slane %v576, %v603
        %v605 = vlaneseq
        %v606 = vshrl.u32 %v605, 7
        %v607 = vsub.s32 0, %v606
        %v608 = vrot.slane %v578, %v607
        %v609 = vlaneseq
        %v610 = vshrl.u32 %v609, 7
        %v611 = vsub.s32 0, %v610
        %v612 = vrot.slane %v580, %v611
        %613 = vrot.lane.b32.xlu0 %v584, 96
        %v614 = vpop.permute.xlu0 %613
        %615 = vrot.lane.b32.xlu0 %v588, 96
        %v616 = vpop.permute.xlu0 %615
        %617 = vrot.lane.b32.xlu0 %v592, 96
        %v618 = vpop.permute.xlu0 %617
        %619 = vrot.lane.b32.xlu0 %v596, 96
        %v620 = vpop.permute.xlu0 %619
        %621 = vrot.lane.b32.xlu0 %v600, 96
        %v622 = vpop.permute.xlu0 %621
        %623 = vrot.lane.b32.xlu0 %v604, 96
        %v624 = vpop.permute.xlu0 %623
        %625 = vrot.lane.b32.xlu0 %v608, 96
        %v626 = vpop.permute.xlu0 %625
        %627 = vrot.lane.b32.xlu0 %v612, 96
        %v628 = vpop.permute.xlu0 %627
        %v637 = vmul.f32 %v473, %v614
        %v638 = vmul.f32 %v474, %v616
        %v639 = vmul.f32 %v475, %v618
        %v640 = vmul.f32 %v476, %v620
        %v641 = vmul.f32 %v477, %v622
        %v642 = vmul.f32 %v478, %v624
        %v643 = vmul.f32 %v479, %v626
        %v644 = vmul.f32 %v480, %v628
        %v645 = vlaneseq
        %v646 = vshrl.u32 %v645, 7
        %v647 = vsub.s32 0, %v646
        %v648 = vrot.slane %v505, %v647
        %v649 = vlaneseq
        %v650 = vshrl.u32 %v649, 7
        %v651 = vsub.s32 0, %v650
        %v652 = vrot.slane %v519, %v651
        %v653 = vlaneseq
        %v654 = vshrl.u32 %v653, 7
        %v655 = vsub.s32 0, %v654
        %v656 = vrot.slane %v527, %v655
        %v657 = vlaneseq
        %v658 = vshrl.u32 %v657, 7
        %v659 = vsub.s32 0, %v658
        %v660 = vrot.slane %v529, %v659
        %v661 = vlaneseq
        %v662 = vshrl.u32 %v661, 7
        %v663 = vsub.s32 0, %v662
        %v664 = vrot.slane %v512, %v663
        %v665 = vlaneseq
        %v666 = vshrl.u32 %v665, 7
        %v667 = vsub.s32 0, %v666
        %v668 = vrot.slane %v526, %v667
        %v669 = vlaneseq
        %v670 = vshrl.u32 %v669, 7
        %v671 = vsub.s32 0, %v670
        %v672 = vrot.slane %v528, %v671
        %v673 = vlaneseq
        %v674 = vshrl.u32 %v673, 7
        %v675 = vsub.s32 0, %v674
        %v676 = vrot.slane %v530, %v675
        %v685 = vadd.f32 %v648, %v637
        %v686 = vadd.f32 %v652, %v638
        %v687 = vadd.f32 %v656, %v639
        %v688 = vadd.f32 %v660, %v640
        %v689 = vadd.f32 %v664, %v641
        %v690 = vadd.f32 %v668, %v642
        %v691 = vadd.f32 %v672, %v643
        %v692 = vadd.f32 %v676, %v644
        %vm693 = vcmask 257024
        %694 = vst.msk [vmem:[%s356] sm:$0xf] %vm693, %v685
        %695 = vst.msk [vmem:[%s356 + $0x4] sm:$0xf] %vm693, %v686
        %696 = vst.msk [vmem:[%s356 + $0x8] sm:$0xf] %vm693, %v687
        %697 = vst.msk [vmem:[%s356 + $0xc] sm:$0xf] %vm693, %v688
        %698 = vst.msk [vmem:[%s356 + $0x10] sm:$0xf] %vm693, %v689
        %699 = vst.msk [vmem:[%s356 + $0x14] sm:$0xf] %vm693, %v690
        %700 = vst.msk [vmem:[%s356 + $0x18] sm:$0xf] %vm693, %v691
        %701 = vst.msk [vmem:[%s356 + $0x1c] sm:$0xf] %vm693, %v692
        %v702 = vmul.f32 %v472, %v472
        %v703 = vmul.f32 %v466, %v466
        %705 = vrot.lane.b32.xlu0 %v702, 96
        %v706 = vpop.permute.xlu0 %705
        %v708 = vadd.f32 %v703, %v706
        %709 = vrot.lane.b32.xlu0 %v466, 96
        %v710 = vpop.permute.xlu0 %709
        %v712 = vsub.f32 %v708, %v710
        %v713 = vsub.f32 %v712, 1.0
        %vm714 = vcmask 261120
        %v715 = vsel %vm714, %v713, 0.0
        %716 = vadd.xlane.f32.xlu0 %v715
        %v717 = vpop.xlane.xlu0 %716
        %v718 = vmul.f32 %v717, 0.5
        %vm719 = vcmask 7168
        %720 = vst.msk [vmem:[%s374] sm:$0xff] %vm719, %v718
        %v721 = vsub.f32 0.0, %v466
        %v722 = vmul.f32 %v721, 1.442695
        %v723 = vpow.pop %v722
        %v724 = vsub.f32 %v685, %v648
        %v725 = vsub.f32 %v686, %v652
        %v726 = vsub.f32 %v687, %v656
        %v727 = vsub.f32 %v688, %v660
        %v728 = vsub.f32 %v689, %v664
        %v729 = vsub.f32 %v690, %v668
        %v730 = vsub.f32 %v691, %v672
        %v731 = vsub.f32 %v692, %v676
        %v732 = vmul.f32 %v724, %v724
        %v733 = vmul.f32 %v725, %v725
        %v734 = vmul.f32 %v726, %v726
        %v735 = vmul.f32 %v727, %v727
        %v736 = vmul.f32 %v728, %v728
        %v737 = vmul.f32 %v729, %v729
        %v738 = vmul.f32 %v730, %v730
        %v739 = vmul.f32 %v731, %v731
        %v741 = vcombine.high %v723, %v723
        %v743 = vunpack.c.l.s4 1966171168
        %v744 = vunpack.c.0.s8 %v743
        %v745 = vlaneseq
        %v746 = vshrl.u32 %v745, 7
        %v747 = vsub.s32 %v744, %v746
        %v748 = vrot.slane %v723, %v747
        %v750 = vunpack.c.l.s4 1966171168
        %v751 = vunpack.c.0.s8 %v750
        %v752 = vlaneseq
        %v753 = vshrl.u32 %v752, 7
        %v754 = vsub.s32 %v751, %v753
        %v755 = vrot.slane %v741, %v754
        %v756 = vcombine.high %v748, %v748
        %v757 = vcombine.high %v755, %v755
        %v759 = vunpack.c.l.s4 1966171168
        %v760 = vunpack.c.0.s8 %v759
        %v761 = vlaneseq
        %v762 = vshrl.u32 %v761, 7
        %v763 = vsub.s32 %v760, %v762
        %v764 = vrot.slane %v748, %v763
        %v766 = vunpack.c.l.s4 1966171168
        %v767 = vunpack.c.0.s8 %v766
        %v768 = vlaneseq
        %v769 = vshrl.u32 %v768, 7
        %v770 = vsub.s32 %v767, %v769
        %v771 = vrot.slane %v755, %v770
        %v773 = vunpack.c.l.s4 1966171168
        %v774 = vunpack.c.0.s8 %v773
        %v775 = vlaneseq
        %v776 = vshrl.u32 %v775, 7
        %v777 = vsub.s32 %v774, %v776
        %v778 = vrot.slane %v756, %v777
        %v780 = vunpack.c.l.s4 1966171168
        %v781 = vunpack.c.0.s8 %v780
        %v782 = vlaneseq
        %v783 = vshrl.u32 %v782, 7
        %v784 = vsub.s32 %v781, %v783
        %v785 = vrot.slane %v757, %v784
        %v786 = vcombine.high %v764, %v764
        %v787 = vcombine.high %v771, %v771
        %v788 = vcombine.high %v778, %v778
        %v789 = vcombine.high %v785, %v785
        %v790 = vlaneseq
        %v791 = vshrl.u32 %v790, 7
        %v792 = vsub.s32 0, %v791
        %v793 = vrot.slane %v764, %v792
        %v794 = vlaneseq
        %v795 = vshrl.u32 %v794, 7
        %v796 = vsub.s32 0, %v795
        %v797 = vrot.slane %v778, %v796
        %v798 = vlaneseq
        %v799 = vshrl.u32 %v798, 7
        %v800 = vsub.s32 0, %v799
        %v801 = vrot.slane %v786, %v800
        %v802 = vlaneseq
        %v803 = vshrl.u32 %v802, 7
        %v804 = vsub.s32 0, %v803
        %v805 = vrot.slane %v788, %v804
        %v806 = vlaneseq
        %v807 = vshrl.u32 %v806, 7
        %v808 = vsub.s32 0, %v807
        %v809 = vrot.slane %v771, %v808
        %v810 = vlaneseq
        %v811 = vshrl.u32 %v810, 7
        %v812 = vsub.s32 0, %v811
        %v813 = vrot.slane %v785, %v812
        %v814 = vlaneseq
        %v815 = vshrl.u32 %v814, 7
        %v816 = vsub.s32 0, %v815
        %v817 = vrot.slane %v787, %v816
        %v818 = vlaneseq
        %v819 = vshrl.u32 %v818, 7
        %v820 = vsub.s32 0, %v819
        %v821 = vrot.slane %v789, %v820
        %822 = vrot.lane.b32.xlu0 %v793, 96
        %v823 = vpop.permute.xlu0 %822
        %824 = vrot.lane.b32.xlu0 %v797, 96
        %v825 = vpop.permute.xlu0 %824
        %826 = vrot.lane.b32.xlu0 %v801, 96
        %v827 = vpop.permute.xlu0 %826
        %828 = vrot.lane.b32.xlu0 %v805, 96
        %v829 = vpop.permute.xlu0 %828
        %830 = vrot.lane.b32.xlu0 %v809, 96
        %v831 = vpop.permute.xlu0 %830
        %832 = vrot.lane.b32.xlu0 %v813, 96
        %v833 = vpop.permute.xlu0 %832
        %834 = vrot.lane.b32.xlu0 %v817, 96
        %v835 = vpop.permute.xlu0 %834
        %836 = vrot.lane.b32.xlu0 %v821, 96
        %v837 = vpop.permute.xlu0 %836
        %v846 = vmul.f32 %v732, %v823
        %v847 = vmul.f32 %v733, %v825
        %v848 = vmul.f32 %v734, %v827
        %v849 = vmul.f32 %v735, %v829
        %v850 = vmul.f32 %v736, %v831
        %v851 = vmul.f32 %v737, %v833
        %v852 = vmul.f32 %v738, %v835
        %v853 = vmul.f32 %v739, %v837
        %v854 = vsel %vm693, %v846, 0.0
        %855 = vadd.xlane.f32.xlu0 %v854
        %v856 = vpop.xlane.xlu0 %855
        %v857 = vsel %vm693, %v847, 0.0
        %858 = vadd.xlane.f32.xlu0 %v857
        %v859 = vpop.xlane.xlu0 %858
        %v860 = vsel %vm693, %v848, 0.0
        %861 = vadd.xlane.f32.xlu0 %v860
        %v862 = vpop.xlane.xlu0 %861
        %v863 = vsel %vm693, %v849, 0.0
        %864 = vadd.xlane.f32.xlu0 %v863
        %v865 = vpop.xlane.xlu0 %864
        %v866 = vsel %vm693, %v850, 0.0
        %867 = vadd.xlane.f32.xlu0 %v866
        %v868 = vpop.xlane.xlu0 %867
        %v869 = vsel %vm693, %v851, 0.0
        %870 = vadd.xlane.f32.xlu0 %v869
        %v871 = vpop.xlane.xlu0 %870
        %v872 = vsel %vm693, %v852, 0.0
        %873 = vadd.xlane.f32.xlu0 %v872
        %v874 = vpop.xlane.xlu0 %873
        %v875 = vsel %vm693, %v853, 0.0
        %876 = vadd.xlane.f32.xlu0 %v875
        %v877 = vpop.xlane.xlu0 %876
        %v878 = vmul.f32 %v856, -0.5
        %v879 = vmul.f32 %v859, -0.5
        %v880 = vmul.f32 %v862, -0.5
        %v881 = vmul.f32 %v865, -0.5
        %v882 = vmul.f32 %v868, -0.5
        %v883 = vmul.f32 %v871, -0.5
        %v884 = vmul.f32 %v874, -0.5
        %v885 = vmul.f32 %v877, -0.5
        %v886 = vsel %vm714, %v710, 0.0
        %887 = vadd.xlane.f32.xlu0 %v886
        %v888 = vpop.xlane.xlu0 %887
        %v889 = vadd.f32 %v888, 58.812065
        %v890 = vmul.f32 %v889, 0.5
        %v892 = vlaneseq
        %v893 = vshrl.u32 %v892, 7
        %v894 = vsub.s32 0, %v893
        %v895 = vrot.slane %v890, %v894
        %v896 = vlaneseq
        %v897 = vshrl.u32 %v896, 7
        %v898 = vsub.s32 1, %v897
        %v899 = vrot.slane %v890, %v898
        %v900 = vlaneseq
        %v901 = vshrl.u32 %v900, 7
        %v902 = vsub.s32 2, %v901
        %v903 = vrot.slane %v890, %v902
        %v904 = vlaneseq
        %v905 = vshrl.u32 %v904, 7
        %v906 = vsub.s32 3, %v905
        %v907 = vrot.slane %v890, %v906
        %v908 = vlaneseq
        %v909 = vshrl.u32 %v908, 7
        %v910 = vsub.s32 4, %v909
        %v911 = vrot.slane %v890, %v910
        %v912 = vlaneseq
        %v913 = vshrl.u32 %v912, 7
        %v914 = vsub.s32 5, %v913
        %v915 = vrot.slane %v890, %v914
        %v916 = vlaneseq
        %v917 = vshrl.u32 %v916, 7
        %v918 = vsub.s32 6, %v917
        %v919 = vrot.slane %v890, %v918
        %v920 = vlaneseq
        %v921 = vshrl.u32 %v920, 7
        %v922 = vsub.s32 7, %v921
        %v923 = vrot.slane %v890, %v922
        %v932 = vsub.f32 %v878, %v895
        %v933 = vsub.f32 %v879, %v899
        %v934 = vsub.f32 %v880, %v903
        %v935 = vsub.f32 %v881, %v907
        %v936 = vsub.f32 %v882, %v911
        %v937 = vsub.f32 %v883, %v915
        %v938 = vsub.f32 %v884, %v919
        %v939 = vsub.f32 %v885, %v923
        %948 = vset.pattern.permute.xlu0 0
        %949 = vperm.xlu0 %948, %v932
        %v950 = vpop.permute.xlu0 %949
        %951 = vset.pattern.permute.xlu0 0
        %952 = vperm.xlu0 %951, %v933
        %v953 = vpop.permute.xlu0 %952
        %954 = vset.pattern.permute.xlu0 0
        %955 = vperm.xlu0 %954, %v934
        %v956 = vpop.permute.xlu0 %955
        %957 = vset.pattern.permute.xlu0 0
        %958 = vperm.xlu0 %957, %v935
        %v959 = vpop.permute.xlu0 %958
        %960 = vset.pattern.permute.xlu0 0
        %961 = vperm.xlu0 %960, %v936
        %v962 = vpop.permute.xlu0 %961
        %963 = vset.pattern.permute.xlu0 0
        %964 = vperm.xlu0 %963, %v937
        %v965 = vpop.permute.xlu0 %964
        %966 = vset.pattern.permute.xlu0 0
        %967 = vperm.xlu0 %966, %v938
        %v968 = vpop.permute.xlu0 %967
        %969 = vset.pattern.permute.xlu0 0
        %970 = vperm.xlu0 %969, %v939
        %v971 = vpop.permute.xlu0 %970
        %v972 = vlaneseq
        %v973 = vand.u32 %v972, 127
        %v974 = vlaneseq
        %v975 = vshrl.u32 %v974, 7
        %v976 = vsub.s32 %v973, %v975
        %v977 = vrot.slane %v950, %v976
        %v978 = vlaneseq
        %v979 = vshrl.u32 %v978, 7
        %v980 = vsub.s32 %v973, %v979
        %v981 = vrot.slane %v953, %v980
        %v982 = vlaneseq
        %v983 = vshrl.u32 %v982, 7
        %v984 = vsub.s32 %v973, %v983
        %v985 = vrot.slane %v956, %v984
        %v986 = vlaneseq
        %v987 = vshrl.u32 %v986, 7
        %v988 = vsub.s32 %v973, %v987
        %v989 = vrot.slane %v959, %v988
        %v990 = vlaneseq
        %v991 = vshrl.u32 %v990, 7
        %v992 = vsub.s32 %v973, %v991
        %v993 = vrot.slane %v962, %v992
        %v994 = vlaneseq
        %v995 = vshrl.u32 %v994, 7
        %v996 = vsub.s32 %v973, %v995
        %v997 = vrot.slane %v965, %v996
        %v998 = vlaneseq
        %v999 = vshrl.u32 %v998, 7
        %v1000 = vsub.s32 %v973, %v999
        %v1001 = vrot.slane %v968, %v1000
        %v1002 = vlaneseq
        %v1003 = vshrl.u32 %v1002, 7
        %v1004 = vsub.s32 %v973, %v1003
        %v1005 = vrot.slane %v971, %v1004
        %vm1006 = vcmask 1041409
        %v1007 = vsel %vm1006, %v981, %v977
        %vm1008 = vcmask 1042434
        %v1009 = vsel %vm1008, %v985, %v1007
        %vm1010 = vcmask 1043459
        %v1011 = vsel %vm1010, %v989, %v1009
        %vm1012 = vcmask 1044484
        %v1013 = vsel %vm1012, %v993, %v1011
        %vm1014 = vcmask 1045509
        %v1015 = vsel %vm1014, %v997, %v1013
        %vm1016 = vcmask 1046534
        %v1017 = vsel %vm1016, %v1001, %v1015
        %vm1018 = vcmask 1047559
        %v1019 = vsel %vm1018, %v1005, %v1017
        %vm1021 = vcmask 31744
        %1022 = vst.msk [vmem:[%s378] sm:$0xff] %vm1021, %v1019
        %s1023 = sand.u32 %s131, 1
        %s1024 = scalar_lea.sflag [#allocation4], %s1023
        %s1025 = sand.u32 %s131, 1
        %s1026 = smul.addr %s1025, 8
        %s1027 = scalar_lea.vmem [#allocation8], %s1026
        %s1028 = sand.u32 %s157, 1
        %s1029 = scalar_lea.sflag [#allocation10], %s1028
        %s1030 = sand.u32 %s157, 1
        %s1031 = smul.addr %s1030, 32
        %s1032 = scalar_lea.vmem [#allocation9], %s1031
        %p1033 = scmp.lt.s32.totalorder %s29, 1
        %s1034 = scalar_select %p1033, %s29, 1
        %s1035 = smul.addr %s1034, 8
        %s1036 = scalar_lea.vmem %s6, %s1035
        %p1037 = scmp.lt.s32.totalorder %s29, 1
        %s1038 = scalar_select %p1037, %s29, 1
        %s1039 = smul.addr %s1038, 8
        %s1040 = scalar_lea.vmem %s7, %s1039
        // Predicated region
        $region49: #{tpu_custom_call.1} parent=35 // pred_check
          %p1041 = pneg %p141
        $region50: #{tpu_custom_call.1} parent=35 // pred_check_branch
          %1043 = sbr.rel (%p1041) target = $region52
        $region51: #{tpu_custom_call.1} parent=35 // pred_region
          %s1045 = ssub.s32 128, 128
          %1046 = vsyncadd %s1024, %s1045
          %s1047 = smul.addr %s29, 128
          %s1048 = scalar_lea.hbm %s4, %s1047
          %s1050 = sshll.u32 %s1027, 4
          %s1051 = int_to_ptr.vmem [resolvable:$true] %s1050
          %1053 = dma.vmem_to_hbm [thread:$0]  %s1051, 128, %s1048, %s1024
        $region52: #{tpu_custom_call.1} parent=35 // pred_fallthru
          _
        // Predicated region
        $region53: #{tpu_custom_call.1} parent=35 // pred_check
          %p1054 = pneg %p167
        $region54: #{tpu_custom_call.1} parent=35 // pred_check_branch
          %1056 = sbr.rel (%p1054) target = $region56
        $region55: #{tpu_custom_call.1} parent=35 // pred_region
          %s1057 = smul.u32 8, %s29
          %s1059 = ssub.s32 512, 512
          %1060 = vsyncadd %s1029, %s1059
          %s1061 = smul.addr %s1057, 64
          %s1062 = scalar_lea.hbm %s5, %s1061
          %s1063 = sshll.u32 %s1032, 4
          %s1064 = int_to_ptr.vmem [resolvable:$true] %s1063
          %1069 = dma.vmem_to_hbm [thread:$0]  %s1064, 512, %s1062, %s1029, 64, 64, 4
        $region56: #{tpu_custom_call.1} parent=35 // pred_fallthru
          _
        // Predicated region
        $region57: #{tpu_custom_call.1} parent=35 // pred_check
          %p1070 = pneg %p193
        $region58: #{tpu_custom_call.1} parent=35 // pred_check_branch
          %1072 = sbr.rel (%p1070) target = $region60
        $region59: #{tpu_custom_call.1} parent=35 // pred_region
          _
        $region60: #{tpu_custom_call.1} parent=35 // pred_fallthru
          _
        // Predicated region
        $region61: #{tpu_custom_call.1} parent=35 // pred_check
          %p1073 = pneg %p219
        $region62: #{tpu_custom_call.1} parent=35 // pred_check_branch
          %1075 = sbr.rel (%p1073) target = $region64
        $region63: #{tpu_custom_call.1} parent=35 // pred_region
          _
        $region64: #{tpu_custom_call.1} parent=35 // pred_fallthru
          _
      $region36: #{tpu_custom_call.1} parent=5 // pred_fallthru
        _
      %p1076 = scmp.le.s32.totalorder 2, %s24
      // Predicated region
      $region65: #{tpu_custom_call.1} parent=5 // pred_check
        %p1077 = pneg %p1076
      $region66: #{tpu_custom_call.1} parent=5 // pred_check_branch
        %1079 = sbr.rel (%p1077) target = $region68
      $region67: #{tpu_custom_call.1} parent=5 // pred_region
        %s1080 = ssub.s32 %s24, 2
        // Predicated region
        $region69: #{tpu_custom_call.1} parent=67 // pred_check
          %p1081 = pneg %p147
        $region70: #{tpu_custom_call.1} parent=67 // pred_check_branch
          %1083 = sbr.rel (%p1081) target = $region72
        $region71: #{tpu_custom_call.1} parent=67 // pred_region
          %s1084 = sand.u32 %s132, 1
          %s1085 = scalar_lea.sflag [#allocation4], %s1084
          %s1086 = sand.u32 %s132, 1
          %s1087 = smul.addr %s1086, 8
          %s1088 = scalar_lea.vmem [#allocation8], %s1087
          %1089 = dma.done %s1085, 128
        $region72: #{tpu_custom_call.1} parent=67 // pred_fallthru
          _
        // Predicated region
        $region73: #{tpu_custom_call.1} parent=67 // pred_check
          %p1090 = pneg %p173
        $region74: #{tpu_custom_call.1} parent=67 // pred_check_branch
          %1092 = sbr.rel (%p1090) target = $region76
        $region75: #{tpu_custom_call.1} parent=67 // pred_region
          %s1093 = sand.u32 %s158, 1
          %s1094 = scalar_lea.sflag [#allocation10], %s1093
          %s1095 = sand.u32 %s158, 1
          %s1096 = smul.addr %s1095, 32
          %s1097 = scalar_lea.vmem [#allocation9], %s1096
          %1098 = dma.done %s1094, 512
        $region76: #{tpu_custom_call.1} parent=67 // pred_fallthru
          _
        // Predicated region
        $region77: #{tpu_custom_call.1} parent=67 // pred_check
          %p1099 = pneg %p199
        $region78: #{tpu_custom_call.1} parent=67 // pred_check_branch
          %1101 = sbr.rel (%p1099) target = $region80
        $region79: #{tpu_custom_call.1} parent=67 // pred_region
          %p1102 = scmp.lt.s32.totalorder %s30, 1
          %s1103 = scalar_select %p1102, %s30, 1
          %s1104 = smul.addr %s1103, 8
          %s1105 = scalar_lea.vmem %s6, %s1104
        $region80: #{tpu_custom_call.1} parent=67 // pred_fallthru
          _
        // Predicated region
        $region81: #{tpu_custom_call.1} parent=67 // pred_check
          %p1106 = pneg %p225
        $region82: #{tpu_custom_call.1} parent=67 // pred_check_branch
          %1108 = sbr.rel (%p1106) target = $region84
        $region83: #{tpu_custom_call.1} parent=67 // pred_region
          %p1109 = scmp.lt.s32.totalorder %s30, 1
          %s1110 = scalar_select %p1109, %s30, 1
          %s1111 = smul.addr %s1110, 8
          %s1112 = scalar_lea.vmem %s7, %s1111
        $region84: #{tpu_custom_call.1} parent=67 // pred_fallthru
          _
      $region68: #{tpu_custom_call.1} parent=5 // pred_fallthru
        _
    $region6: #{tpu_custom_call.1} parent=1 // loop_footer
      %s28 = sadd.s32 1, %s24
    $region7: #{tpu_custom_call.1} parent=1 // loop_footer_branch
      %23 = sbr.rel target = $region3
    $region8: #{tpu_custom_call.1} parent=1 // loop_exit
      _
    %1113 = vsyncpa [#allocation3], 1
    %s1114 = scalar_lea.sflag [#allocation3], 1
    %1115 = vsyncpa %s1114, 1
    %1116 = vsyncpa [#allocation6], 1
    %1117 = vsyncpa [#allocation4], 1
    %s1118 = scalar_lea.sflag [#allocation4], 1
    %1119 = vsyncpa %s1118, 1
    %1120 = vsyncpa [#allocation10], 1
    %s1121 = scalar_lea.sflag [#allocation10], 1
    %1122 = vsyncpa %s1121, 1

</llo_original>
